<compile_context>
chip_gen: v6e
topology: v6e:2x2x1
jax: 0.10.0
libtpu: 0.0.40
codegen_flags: <defaults>
</compile_context>

<pallas_src>
import jax
import jax.numpy as jnp
from jax.experimental import pallas as pl
from jax.experimental.pallas import tpu as pltpu

ID_DIMS = 150
EXP_DIMS = 52
K_TOTAL = ID_DIMS + EXP_DIMS      # 202
K_PAD = 208                       # per-coordinate K padded to a bf16 sublane multiple (16)
KC = 3 * K_PAD                    # fused contraction length (624, multiple of 16)


def _round_up(x, m):
    return ((x + m - 1) // m) * m


def so3_exponential_map(log_rot, eps=1e-8):
    """Rodrigues formula: (B, 3) axis-angle -> (B, 3, 3) rotation matrices."""
    theta2 = jnp.sum(log_rot ** 2, axis=-1)
    theta = jnp.sqrt(jnp.clip(theta2, eps))
    fac1 = jnp.sin(theta) / theta
    fac2 = (1.0 - jnp.cos(theta)) / (theta ** 2)
    wx, wy, wz = log_rot[:, 0], log_rot[:, 1], log_rot[:, 2]
    zeros = jnp.zeros_like(wx)
    K = jnp.stack(
        [
            jnp.stack([zeros, -wz, wy], axis=-1),
            jnp.stack([wz, zeros, -wx], axis=-1),
            jnp.stack([-wy, wx, zeros], axis=-1),
        ],
        axis=-2,
    )  # (B, 3, 3)
    K2 = jnp.einsum("bij,bjk->bik", K, K)
    I = jnp.eye(3, dtype=log_rot.dtype)[None]
    return I + fac1[:, None, None] * K + fac2[:, None, None] * K2


def faceverse_kernel(eff_ref, basis_ref, mean_ref, rt_ref, out_ref):
    """Per vertex tile (all layout work done at prepare/wrapper time):

         out[r, v] = sum_c eff[r, c] * basis[c, v]            (one bf16 MXU matmul, f32 acc)
                   + sum_j rt[r, j] * mean[j, v] + rt[r, 3]    (f32 VPU bias: (scale*R)@mean_c + T)

    with r = b*3 + i (coordinate i of batch b), c = j*K_PAD + k.
    """
    r = jnp.dot(eff_ref[...], basis_ref[...], preferred_element_type=jnp.float32)

    mean = mean_ref[...]          # (3, tile_v) f32, centered mean shape
    rt = rt_ref[...]              # (B3p, 4) f32: [scale*R row | T]

    bias = (rt[:, 0:1] * mean[0:1, :]
            + rt[:, 1:2] * mean[1:2, :]
            + rt[:, 2:3] * mean[2:3, :]
            + rt[:, 3:4])

    out_ref[...] = r + bias       # single lane-dense (B3p, tile_v) store


def prepare_faceverse_buffers(idBase, exBase, meanshape, *, tile_v=4096,
                              basis_dtype=jnp.bfloat16):
    """One-time (model-load) re-layout of the constant buffers.

    Returns:
      basis : (3*K_PAD, V_pad) basis_dtype -- fused id|exp basis, row = j*K_PAD + k
      mean  : (3, V_pad) f32              -- centered mean shape, coordinate-major
    """
    V = idBase.shape[0] // 3
    # tile_v: multiple of 128, capped at 8192 (double-buffered basis slab <= ~20 MB,
    # safe even on v7x's 64 MiB physical VMEM), clamped to the padded vertex count.
    tile_v = _round_up(min(max(tile_v, 128), 8192), 128)
    tile_v = min(tile_v, _round_up(V, 128))
    V_pad = _round_up(V, tile_v)
    n_tiles = V_pad // tile_v

    id_b = idBase.reshape(V, 3, ID_DIMS)
    ex_b = exBase.reshape(V, 3, EXP_DIMS)
    basis = jnp.concatenate([id_b, ex_b], axis=-1)                         # (V, 3, 202)
    basis = jnp.pad(basis, ((0, V_pad - V), (0, 0), (0, K_PAD - K_TOTAL)))  # zero pad v, k
    basis = jnp.transpose(basis, (1, 2, 0)).reshape(KC, V_pad)             # row = j*K_PAD + k
    basis = basis.astype(basis_dtype)

    mean_v3 = meanshape.reshape(V, 3)
    center = jnp.mean(mean_v3, axis=0)                                     # (3,)
    mean3 = (mean_v3 - center[None, :]).T                                  # (3, V), centered
    mean3 = jnp.pad(mean3, ((0, 0), (0, V_pad - V))).astype(jnp.float32)

    return dict(basis=basis, mean=mean3, V=V, V_pad=V_pad, tile_v=tile_v,
                n_tiles=n_tiles)


def _dimension_semantics(n_tiles):
    # v7x has 2 TensorCores per chip: shard the vertex-tile axis across them with
    # CORE_PARALLEL.  On single-TC v5e/v6e "parallel" vs "arbitrary" barely changes
    # codegen, so plain "parallel" is kept there.
    try:
        kind = jax.devices()[0].device_kind.lower()
        if n_tiles >= 2 and "v7" in kind and hasattr(pltpu, "CORE_PARALLEL"):
            return (pltpu.CORE_PARALLEL,)
    except Exception:
        pass
    return ("parallel",)


def _vmem_limit_bytes(b3p, tile_v, basis_itemsize):
    per_tile = (KC * tile_v * basis_itemsize   # basis slab
                + 3 * tile_v * 4               # mean slab
                + b3p * tile_v * 4)            # output slab
    small = b3p * KC * basis_itemsize + b3p * 4 * 4
    need = 2 * (per_tile + small) + (4 << 20)  # double-buffered + headroom
    return int(min(max(need, 16 << 20), 48 << 20))


def faceverse_forward(id_coeff, exp_coeff, scale, pose, buffers, kp_inds):
    """Reproduces FaceVerseModule.forward(): returns (vertices (B,V,3), landmarks (B,NK,3))."""
    basis, mean3 = buffers["basis"], buffers["mean"]
    V, V_pad, tile_v, n_tiles = (buffers["V"], buffers["V_pad"],
                                 buffers["tile_v"], buffers["n_tiles"])
    B = exp_coeff.shape[0]
    B3 = 3 * B
    B3p = _round_up(B3, 8)   # pad rows to a sublane multiple -> fully unmasked stores

    # id_coeff.repeat(batch_size, 1); fuse id+exp and zero-pad K to K_PAD.
    idc = jnp.tile(id_coeff, (B, 1))
    coeff = jnp.concatenate([idc, exp_coeff], axis=-1)                  # (B, 202) f32
    coeff = jnp.pad(coeff, ((0, 0), (0, K_PAD - K_TOTAL)))              # (B, 208), zeros

    # Tiny pose glue: fold scale into R, then fold R into the coefficients.
    R = so3_exponential_map(pose[:, :3])                                # (B, 3, 3)
    T = pose[:, 3:]                                                     # (B, 3)
    Rs = scale[0] * R                                                   # (B, 3, 3)

    # eff[b*3+i, j*K_PAD+k] = Rs[b,i,j] * coeff[b,k]  (matches basis row order).
    # NOTE: bf16 coeff/basis is a documented accuracy trade-off (~1e-2 tolerance);
    # the large-magnitude mean + translation stay on the f32 bias path below.
    eff = (Rs[:, :, :, None] * coeff[:, None, None, :]).reshape(B3, KC)
    eff = jnp.pad(eff, ((0, B3p - B3), (0, 0))).astype(basis.dtype)     # (B3p, KC)

    # Per-row f32 bias operands [Rs[b,i,:] | T[b,i]] -> bias = Rs @ mean_c + T.
    rt = jnp.concatenate([Rs.reshape(B3, 3), T.reshape(B3, 1)], axis=-1)
    rt = jnp.pad(rt, ((0, B3p - B3), (0, 0))).astype(jnp.float32)       # (B3p, 4)

    basis_itemsize = jnp.dtype(basis.dtype).itemsize
    cost = pl.CostEstimate(
        flops=2 * B3p * KC * V_pad,
        transcendentals=0,
        bytes_accessed=(int(basis.size) * basis_itemsize
                        + int(mean3.size) * 4
                        + int(eff.size) * basis_itemsize
                        + int(rt.size) * 4
                        + B3p * V_pad * 4),
    )

    out = pl.pallas_call(
        faceverse_kernel,
        out_shape=jax.ShapeDtypeStruct((B3p, V_pad), jnp.float32),
        grid_spec=pltpu.PrefetchScalarGridSpec(
            num_scalar_prefetch=0,
            grid=(n_tiles,),
            in_specs=[
                pl.BlockSpec((B3p, KC), lambda v: (0, 0)),       # effective coeffs
                pl.BlockSpec((KC, tile_v), lambda v: (0, v)),    # streamed basis slab
                pl.BlockSpec((3, tile_v), lambda v: (0, v)),     # f32 centered mean slab
                pl.BlockSpec((B3p, 4), lambda v: (0, 0)),        # [scale*R | T]
            ],
            out_specs=pl.BlockSpec((B3p, tile_v), lambda v: (0, v)),
        ),
        compiler_params=pltpu.CompilerParams(
            dimension_semantics=_dimension_semantics(n_tiles),
            vmem_limit_bytes=_vmem_limit_bytes(B3p, tile_v, basis_itemsize),
        ),
        cost_estimate=cost,
    )(eff, basis, mean3, rt)

    out = out[:B3].reshape(B, 3, V_pad)[:, :, :V]                       # (B, 3, V)
    # Landmark gather on the pre-transpose layout (16 lane columns) BEFORE the
    # big transpose, then the (B,3,V) -> (B,V,3) rearrangement for PyTorch order.
    landmarks = jnp.transpose(out[:, :, kp_inds], (0, 2, 1))            # (B, NK, 3)
    vertices = jnp.transpose(out, (0, 2, 1))                            # (B, V, 3)
    return vertices, landmarks


def reference_forward(id_coeff, exp_coeff, scale, pose,
                      idBase, exBase, meanshape, kp_inds):
    """Pure-JAX f32 reference of FaceVerseModule.forward()."""
    B = exp_coeff.shape[0]
    V = idBase.shape[0] // 3
    idc = jnp.tile(id_coeff, (B, 1))
    face_shape = idc @ idBase.T + exp_coeff @ exBase.T + meanshape      # (B, 3V)
    face_shape = face_shape.reshape(B, V, 3)
    face_shape = face_shape - meanshape.reshape(1, V, 3).mean(axis=1, keepdims=True)
    R = so3_exponential_map(pose[:, :3])
    T = pose[:, 3:]
    vertices = jnp.einsum("bvj,bij->bvi", face_shape * scale[0], R) + T[:, None, :]
    landmarks = vertices[:, kp_inds, :]
    return vertices, landmarks


if __name__ == "__main__":
    def run_case(B, V, NK, tile_v):
        key = jax.random.PRNGKey(0)
        k = jax.random.split(key, 6)

        # Synthetic deterministic "model buffers" (shapes as in the module __init__,
        # post the sign flips done there).
        idBase = jax.random.normal(k[0], (3 * V, ID_DIMS), jnp.float32) * 0.01
        exBase = jax.random.normal(k[1], (3 * V, EXP_DIMS), jnp.float32) * 0.01
        meanshape = jax.random.normal(k[2], (1, 3 * V), jnp.float32)
        kp_inds = (jnp.arange(NK, dtype=jnp.int32) * 31) % V

        # Parameters (nn.Parameter shapes); random instead of zeros for a non-trivial test.
        id_coeff = jax.random.normal(k[3], (1, ID_DIMS), jnp.float32) * 0.1
        exp_coeff = jax.random.normal(k[4], (B, EXP_DIMS), jnp.float32) * 0.1
        scale = jnp.ones((1,), jnp.float32) * 0.3
        pose = jax.random.normal(k[5], (B, 6), jnp.float32) * 0.1

        # One-time (model-load) buffer preparation, then the per-call forward.
        buffers = prepare_faceverse_buffers(idBase, exBase, meanshape, tile_v=tile_v)
        vertices, landmarks = faceverse_forward(
            id_coeff, exp_coeff, scale, pose, buffers, kp_inds)
        jax.block_until_ready((vertices, landmarks))

        ref_v, ref_l = reference_forward(
            id_coeff, exp_coeff, scale, pose, idBase, exBase, meanshape, kp_inds)
        assert vertices.shape == (B, V, 3) and landmarks.shape == (B, NK, 3)
        assert jnp.allclose(vertices, ref_v, atol=1e-2, rtol=1e-2)
        assert jnp.allclose(landmarks, ref_l, atol=1e-2, rtol=1e-2)

    run_case(B=2, V=512, NK=16, tile_v=4096)   # single-tile path
    run_case(B=2, V=2000, NK=16, tile_v=512)   # vertex padding + 4-tile grid path
    print("KERNEL_OK")
</pallas_src>

<mosaic_0001>
module attributes {stable_mosaic.version = 11 : i64} {
  func.func @faceverse_kernel(%arg0: i32, %arg1: memref<8x624xbf16, #tpu.memory_space<vmem>>, %arg2: memref<624x512xbf16, #tpu.memory_space<vmem>>, %arg3: memref<3x512xf32, #tpu.memory_space<vmem>>, %arg4: memref<8x4xf32, #tpu.memory_space<vmem>>, %arg5: memref<8x512xf32, #tpu.memory_space<vmem>>) attributes {dimension_semantics = [#tpu.dimension_semantics<parallel>], iteration_bounds = array<i64: 1>, scalar_prefetch = 0 : i64, scratch_operands = 0 : i64, tpu.core_type = #tpu.core_type<tc>, window_params = [{pipeline_mode = #tpu.pipeline_mode<synchronous>, transform_indices = @transform_0, window_bounds = array<i64: 8, 624>}, {transform_indices = @transform_1, window_bounds = array<i64: 624, 512>}, {transform_indices = @transform_2, window_bounds = array<i64: 3, 512>}, {pipeline_mode = #tpu.pipeline_mode<synchronous>, transform_indices = @transform_3, window_bounds = array<i64: 8, 4>}, {transform_indices = @transform_4, window_bounds = array<i64: 8, 512>}]} {
    %c0 = arith.constant 0 : index
    %c0_0 = arith.constant 0 : index
    %0 = vector.load %arg1[%c0, %c0_0] : memref<8x624xbf16, #tpu.memory_space<vmem>>, vector<8x624xbf16>
    %c0_1 = arith.constant 0 : index
    %c0_2 = arith.constant 0 : index
    %1 = vector.load %arg2[%c0_1, %c0_2] : memref<624x512xbf16, #tpu.memory_space<vmem>>, vector<624x512xbf16>
    %cst = arith.constant dense<0.000000e+00> : vector<8x512xf32>
    %2 = tpu.matmul %0, %1, %cst {dimension_numbers = #tpu.dot_dimension_numbers<[1], [0], [0], [1], [0, 0, 1, 1], [], []>} : vector<8x624xbf16>, vector<624x512xbf16>, vector<8x512xf32> -> vector<8x512xf32>
    %c0_3 = arith.constant 0 : index
    %c0_4 = arith.constant 0 : index
    %3 = vector.load %arg3[%c0_3, %c0_4] : memref<3x512xf32, #tpu.memory_space<vmem>>, vector<3x512xf32>
    %c0_5 = arith.constant 0 : index
    %c0_6 = arith.constant 0 : index
    %4 = vector.load %arg4[%c0_5, %c0_6] : memref<8x4xf32, #tpu.memory_space<vmem>>, vector<8x4xf32>
    %5 = vector.extract_strided_slice %4 {offsets = [0, 0], sizes = [8, 1], strides = [1, 1]} : vector<8x4xf32> to vector<8x1xf32>
    %6 = vector.extract_strided_slice %3 {offsets = [0, 0], sizes = [1, 512], strides = [1, 1]} : vector<3x512xf32> to vector<1x512xf32>
    %7 = vector.broadcast %5 : vector<8x1xf32> to vector<8x512xf32>
    %8 = vector.broadcast %6 : vector<1x512xf32> to vector<8x512xf32>
    %9 = arith.mulf %7, %8 : vector<8x512xf32>
    %10 = vector.extract_strided_slice %4 {offsets = [0, 1], sizes = [8, 1], strides = [1, 1]} : vector<8x4xf32> to vector<8x1xf32>
    %11 = vector.extract_strided_slice %3 {offsets = [1, 0], sizes = [1, 512], strides = [1, 1]} : vector<3x512xf32> to vector<1x512xf32>
    %12 = vector.broadcast %10 : vector<8x1xf32> to vector<8x512xf32>
    %13 = vector.broadcast %11 : vector<1x512xf32> to vector<8x512xf32>
    %14 = arith.mulf %12, %13 : vector<8x512xf32>
    %15 = arith.addf %9, %14 : vector<8x512xf32>
    %16 = vector.extract_strided_slice %4 {offsets = [0, 2], sizes = [8, 1], strides = [1, 1]} : vector<8x4xf32> to vector<8x1xf32>
    %17 = vector.extract_strided_slice %3 {offsets = [2, 0], sizes = [1, 512], strides = [1, 1]} : vector<3x512xf32> to vector<1x512xf32>
    %18 = vector.broadcast %16 : vector<8x1xf32> to vector<8x512xf32>
    %19 = vector.broadcast %17 : vector<1x512xf32> to vector<8x512xf32>
    %20 = arith.mulf %18, %19 : vector<8x512xf32>
    %21 = arith.addf %15, %20 : vector<8x512xf32>
    %22 = vector.extract_strided_slice %4 {offsets = [0, 3], sizes = [8, 1], strides = [1, 1]} : vector<8x4xf32> to vector<8x1xf32>
    %23 = vector.broadcast %22 : vector<8x1xf32> to vector<8x512xf32>
    %24 = arith.addf %21, %23 : vector<8x512xf32>
    %25 = arith.addf %2, %24 : vector<8x512xf32>
    %c0_7 = arith.constant 0 : index
    %c0_8 = arith.constant 0 : index
    %26 = vector.load %arg5[%c0_7, %c0_8] : memref<8x512xf32, #tpu.memory_space<vmem>>, vector<8x512xf32>
    tpu.vector_store %arg5[%c0_7, %c0_8], %25 {strides = array<i32>} : memref<8x512xf32, #tpu.memory_space<vmem>>, vector<8x512xf32>,
    return
  }
  func.func @transform_0(%arg0: i32) -> (i32, i32) {
    %c0_i32 = arith.constant 0 : i32
    %c0_i32_0 = arith.constant 0 : i32
    %c0_i32_1 = arith.constant 0 : i32
    return %c0_i32, %c0_i32_0 : i32, i32
  }
  func.func @transform_1(%arg0: i32) -> (i32, i32) {
    %c0_i32 = arith.constant 0 : i32
    %c0_i32_0 = arith.constant 0 : i32
    return %c0_i32, %arg0 : i32, i32
  }
  func.func @transform_2(%arg0: i32) -> (i32, i32) {
    %c0_i32 = arith.constant 0 : i32
    %c0_i32_0 = arith.constant 0 : i32
    return %c0_i32, %arg0 : i32, i32
  }
  func.func @transform_3(%arg0: i32) -> (i32, i32) {
    %c0_i32 = arith.constant 0 : i32
    %c0_i32_0 = arith.constant 0 : i32
    %c0_i32_1 = arith.constant 0 : i32
    return %c0_i32, %c0_i32_0 : i32, i32
  }
  func.func @transform_4(%arg0: i32) -> (i32, i32) {
    %c0_i32 = arith.constant 0 : i32
    %c0_i32_0 = arith.constant 0 : i32
    return %c0_i32, %arg0 : i32, i32
  }
}

</mosaic_0001>

<llo_original>
// kernel: tpu_custom_call.1
$region0: #{tpu_custom_call.1}
  #allocation0 [shape = 'u32[]', space=smem, size = 0x4, offset = 0x4, fixed_abs, tag = 'smem constant byte address 0x4 - core index']
  #allocation1 [shape = 'u32[144,128]{1,0:T(1,128)}', space=vmem, size = 0x12000, scoped, tag = 'internal scratch']
  %s0 = inlined_call_operand.hbm [shape: bf16[8,624], index: 0, kind: input, shape index: {}]
  %s1 = inlined_call_operand.hbm [shape: bf16[624,512], index: 1, kind: input, shape index: {}]
  %s2 = inlined_call_operand.hbm [shape: f32[3,512], index: 2, kind: input, shape index: {}]
  %s3 = inlined_call_operand.vmem [shape: f32[8,4], index: 3, kind: input, shape index: {}]
  %s4 = inlined_call_operand.hbm [shape: f32[8,512], index: 4, kind: output, shape index: {}]
  %s5 = sld [smem:[#allocation0]]
  $region38: #{tpu_custom_call.1} parent=0
    _
  %s7 = ssub.s32 1, %s5
  %s8 = scalar_select 0, %s7, %s5
  $region1: #{tpu_custom_call.1} parent=0
    #allocation2 [shape = 'u8[10240]{0}', space=vmem, size = 0x2800, scoped, tag = 'input window, operand 0, single buffered']
    #allocation3 [shape = 's32[1]{0}', space=sflag, size = 0x4, scoped, tag = 'scoped memory for tpu_custom_call.1']
    #allocation4 [shape = 's32[1]{0}', space=sflag, size = 0x4, scoped, tag = 'scoped memory for tpu_custom_call.1']
    #allocation5 [shape = 'u8[638976]{0}', space=vmem, size = 0x9c000, scoped, tag = 'input window, operand 1, single buffered']
    #allocation6 [shape = 's32[1]{0}', space=sflag, size = 0x4, scoped, tag = 'scoped memory for tpu_custom_call.1']
    #allocation7 [shape = 'u8[8192]{0}', space=vmem, size = 0x2000, scoped, tag = 'input window, operand 2, single buffered']
    #allocation8 [shape = 'u8[16384]{0}', space=vmem, size = 0x4000, scoped, tag = 'output window, operand 0, single buffered']
    %9 = vsyncpa [#allocation3], 0
    %10 = vsyncpa [#allocation6], 0
    %11 = vsyncpa [#allocation4], 0
    // Predicated region
    $region2: #{tpu_custom_call.1} parent=1 // pred_check
      _
    $region3: #{tpu_custom_call.1} parent=1 // pred_check_branch
      %13 = sbr.rel (0) target = $region5
    $region4: #{tpu_custom_call.1} parent=1 // pred_region
      %s15 = ssub.s32 320, 320
      %16 = vsyncadd [#allocation3], %s15
      %s18 = sshll.u32 [#allocation2], 4
      %s19 = int_to_ptr.vmem [resolvable:$true] %s18
      %21 = dma.hbm_to_vmem [thread:$0]  %s0, 320, %s19, [#allocation3]
    $region5: #{tpu_custom_call.1} parent=1 // pred_fallthru
      _
    // Predicated region
    $region6: #{tpu_custom_call.1} parent=1 // pred_check
      _
    $region7: #{tpu_custom_call.1} parent=1 // pred_check_branch
      %23 = sbr.rel (0) target = $region9
    $region8: #{tpu_custom_call.1} parent=1 // pred_region
      %s25 = ssub.s32 19968, 19968
      %26 = vsyncadd [#allocation6], %s25
      %s27 = sshll.u32 [#allocation5], 4
      %s28 = int_to_ptr.vmem [resolvable:$true] %s27
      %33 = dma.hbm_to_vmem [thread:$0]  %s1, 19968, %s28, [#allocation6], 256, 256, 16
    $region9: #{tpu_custom_call.1} parent=1 // pred_fallthru
      _
    // Predicated region
    $region10: #{tpu_custom_call.1} parent=1 // pred_check
      _
    $region11: #{tpu_custom_call.1} parent=1 // pred_check_branch
      %35 = sbr.rel (0) target = $region13
    $region12: #{tpu_custom_call.1} parent=1 // pred_region
      %s37 = ssub.s32 256, 256
      %38 = vsyncadd [#allocation6], %s37
      %s40 = sshll.u32 [#allocation7], 4
      %s41 = int_to_ptr.vmem [resolvable:$true] %s40
      %43 = dma.hbm_to_vmem [thread:$0]  %s2, 256, %s41, [#allocation6]
    $region13: #{tpu_custom_call.1} parent=1 // pred_fallthru
      _
    // Predicated region
    $region14: #{tpu_custom_call.1} parent=1 // pred_check
      _
    $region15: #{tpu_custom_call.1} parent=1 // pred_check_branch
      %45 = sbr.rel (0) target = $region17
    $region16: #{tpu_custom_call.1} parent=1 // pred_region
      _
    $region17: #{tpu_custom_call.1} parent=1 // pred_fallthru
      _
    // Predicated region
    $region18: #{tpu_custom_call.1} parent=1 // pred_check
      _
    $region19: #{tpu_custom_call.1} parent=1 // pred_check_branch
      %47 = sbr.rel (0) target = $region21
    $region20: #{tpu_custom_call.1} parent=1 // pred_region
      %48 = dma.done [#allocation3], 320
    $region21: #{tpu_custom_call.1} parent=1 // pred_fallthru
      _
    // Predicated region
    $region22: #{tpu_custom_call.1} parent=1 // pred_check
      _
    $region23: #{tpu_custom_call.1} parent=1 // pred_check_branch
      %50 = sbr.rel (0) target = $region25
    $region24: #{tpu_custom_call.1} parent=1 // pred_region
      %51 = dma.done [#allocation6], 19968
    $region25: #{tpu_custom_call.1} parent=1 // pred_fallthru
      _
    // Predicated region
    $region26: #{tpu_custom_call.1} parent=1 // pred_check
      _
    $region27: #{tpu_custom_call.1} parent=1 // pred_check_branch
      %53 = sbr.rel (0) target = $region29
    $region28: #{tpu_custom_call.1} parent=1 // pred_region
      %54 = dma.done [#allocation6], 256
    $region29: #{tpu_custom_call.1} parent=1 // pred_fallthru
      _
    %v56 = vld [vmem:[#allocation2] sm:$0xff]
    %v57 = vld [vmem:[#allocation2 + $0x8] sm:$0xff]
    %v58 = vld [vmem:[#allocation2 + $0x10] sm:$0xf]
    %v59 = vld [vmem:[#allocation5] sm:$0xff]
    %v60 = vld [vmem:[#allocation5 + $0x8] sm:$0xff]
    %v61 = vld [vmem:[#allocation5 + $0x10] sm:$0xff]
    %v62 = vld [vmem:[#allocation5 + $0x18] sm:$0xff]
    %v63 = vld [vmem:[#allocation5 + $0x20] sm:$0xff]
    %v64 = vld [vmem:[#allocation5 + $0x28] sm:$0xff]
    %v65 = vld [vmem:[#allocation5 + $0x30] sm:$0xff]
    %v66 = vld [vmem:[#allocation5 + $0x38] sm:$0xff]
    %v67 = vld [vmem:[#allocation5 + $0x40] sm:$0xff]
    %v68 = vld [vmem:[#allocation5 + $0x48] sm:$0xff]
    %v69 = vld [vmem:[#allocation5 + $0x50] sm:$0xff]
    %v70 = vld [vmem:[#allocation5 + $0x58] sm:$0xff]
    %v71 = vld [vmem:[#allocation5 + $0x60] sm:$0xff]
    %v72 = vld [vmem:[#allocation5 + $0x68] sm:$0xff]
    %v73 = vld [vmem:[#allocation5 + $0x70] sm:$0xff]
    %v74 = vld [vmem:[#allocation5 + $0x78] sm:$0xff]
    %v75 = vld [vmem:[#allocation5 + $0x80] sm:$0xff]
    %v76 = vld [vmem:[#allocation5 + $0x88] sm:$0xff]
    %v77 = vld [vmem:[#allocation5 + $0x90] sm:$0xff]
    %v78 = vld [vmem:[#allocation5 + $0x98] sm:$0xff]
    %v79 = vld [vmem:[#allocation5 + $0xa0] sm:$0xff]
    %v80 = vld [vmem:[#allocation5 + $0xa8] sm:$0xff]
    %v81 = vld [vmem:[#allocation5 + $0xb0] sm:$0xff]
    %v82 = vld [vmem:[#allocation5 + $0xb8] sm:$0xff]
    %v83 = vld [vmem:[#allocation5 + $0xc0] sm:$0xff]
    %v84 = vld [vmem:[#allocation5 + $0xc8] sm:$0xff]
    %v85 = vld [vmem:[#allocation5 + $0xd0] sm:$0xff]
    %v86 = vld [vmem:[#allocation5 + $0xd8] sm:$0xff]
    %v87 = vld [vmem:[#allocation5 + $0xe0] sm:$0xff]
    %v88 = vld [vmem:[#allocation5 + $0xe8] sm:$0xff]
    %v89 = vld [vmem:[#allocation5 + $0xf0] sm:$0xff]
    %v90 = vld [vmem:[#allocation5 + $0xf8] sm:$0xff]
    %v91 = vld [vmem:[#allocation5 + $0x100] sm:$0xff]
    %v92 = vld [vmem:[#allocation5 + $0x108] sm:$0xff]
    %v93 = vld [vmem:[#allocation5 + $0x110] sm:$0xff]
    %v94 = vld [vmem:[#allocation5 + $0x118] sm:$0xff]
    %v95 = vld [vmem:[#allocation5 + $0x120] sm:$0xff]
    %v96 = vld [vmem:[#allocation5 + $0x128] sm:$0xff]
    %v97 = vld [vmem:[#allocation5 + $0x130] sm:$0xff]
    %v98 = vld [vmem:[#allocation5 + $0x138] sm:$0xff]
    %v99 = vld [vmem:[#allocation5 + $0x140] sm:$0xff]
    %v100 = vld [vmem:[#allocation5 + $0x148] sm:$0xff]
    %v101 = vld [vmem:[#allocation5 + $0x150] sm:$0xff]
    %v102 = vld [vmem:[#allocation5 + $0x158] sm:$0xff]
    %v103 = vld [vmem:[#allocation5 + $0x160] sm:$0xff]
    %v104 = vld [vmem:[#allocation5 + $0x168] sm:$0xff]
    %v105 = vld [vmem:[#allocation5 + $0x170] sm:$0xff]
    %v106 = vld [vmem:[#allocation5 + $0x178] sm:$0xff]
    %v107 = vld [vmem:[#allocation5 + $0x180] sm:$0xff]
    %v108 = vld [vmem:[#allocation5 + $0x188] sm:$0xff]
    %v109 = vld [vmem:[#allocation5 + $0x190] sm:$0xff]
    %v110 = vld [vmem:[#allocation5 + $0x198] sm:$0xff]
    %v111 = vld [vmem:[#allocation5 + $0x1a0] sm:$0xff]
    %v112 = vld [vmem:[#allocation5 + $0x1a8] sm:$0xff]
    %v113 = vld [vmem:[#allocation5 + $0x1b0] sm:$0xff]
    %v114 = vld [vmem:[#allocation5 + $0x1b8] sm:$0xff]
    %v115 = vld [vmem:[#allocation5 + $0x1c0] sm:$0xff]
    %v116 = vld [vmem:[#allocation5 + $0x1c8] sm:$0xff]
    %v117 = vld [vmem:[#allocation5 + $0x1d0] sm:$0xff]
    %v118 = vld [vmem:[#allocation5 + $0x1d8] sm:$0xff]
    %v119 = vld [vmem:[#allocation5 + $0x1e0] sm:$0xff]
    %v120 = vld [vmem:[#allocation5 + $0x1e8] sm:$0xff]
    %v121 = vld [vmem:[#allocation5 + $0x1f0] sm:$0xff]
    %v122 = vld [vmem:[#allocation5 + $0x1f8] sm:$0xff]
    %v123 = vld [vmem:[#allocation5 + $0x200] sm:$0xff]
    %v124 = vld [vmem:[#allocation5 + $0x208] sm:$0xff]
    %v125 = vld [vmem:[#allocation5 + $0x210] sm:$0xff]
    %v126 = vld [vmem:[#allocation5 + $0x218] sm:$0xff]
    %v127 = vld [vmem:[#allocation5 + $0x220] sm:$0xff]
    %v128 = vld [vmem:[#allocation5 + $0x228] sm:$0xff]
    %v129 = vld [vmem:[#allocation5 + $0x230] sm:$0xff]
    %v130 = vld [vmem:[#allocation5 + $0x238] sm:$0xff]
    %v131 = vld [vmem:[#allocation5 + $0x240] sm:$0xff]
    %v132 = vld [vmem:[#allocation5 + $0x248] sm:$0xff]
    %v133 = vld [vmem:[#allocation5 + $0x250] sm:$0xff]
    %v134 = vld [vmem:[#allocation5 + $0x258] sm:$0xff]
    %v135 = vld [vmem:[#allocation5 + $0x260] sm:$0xff]
    %v136 = vld [vmem:[#allocation5 + $0x268] sm:$0xff]
    %v137 = vld [vmem:[#allocation5 + $0x270] sm:$0xff]
    %v138 = vld [vmem:[#allocation5 + $0x278] sm:$0xff]
    %v139 = vld [vmem:[#allocation5 + $0x280] sm:$0xff]
    %v140 = vld [vmem:[#allocation5 + $0x288] sm:$0xff]
    %v141 = vld [vmem:[#allocation5 + $0x290] sm:$0xff]
    %v142 = vld [vmem:[#allocation5 + $0x298] sm:$0xff]
    %v143 = vld [vmem:[#allocation5 + $0x2a0] sm:$0xff]
    %v144 = vld [vmem:[#allocation5 + $0x2a8] sm:$0xff]
    %v145 = vld [vmem:[#allocation5 + $0x2b0] sm:$0xff]
    %v146 = vld [vmem:[#allocation5 + $0x2b8] sm:$0xff]
    %v147 = vld [vmem:[#allocation5 + $0x2c0] sm:$0xff]
    %v148 = vld [vmem:[#allocation5 + $0x2c8] sm:$0xff]
    %v149 = vld [vmem:[#allocation5 + $0x2d0] sm:$0xff]
    %v150 = vld [vmem:[#allocation5 + $0x2d8] sm:$0xff]
    %v151 = vld [vmem:[#allocation5 + $0x2e0] sm:$0xff]
    %v152 = vld [vmem:[#allocation5 + $0x2e8] sm:$0xff]
    %v153 = vld [vmem:[#allocation5 + $0x2f0] sm:$0xff]
    %v154 = vld [vmem:[#allocation5 + $0x2f8] sm:$0xff]
    %v155 = vld [vmem:[#allocation5 + $0x300] sm:$0xff]
    %v156 = vld [vmem:[#allocation5 + $0x308] sm:$0xff]
    %v157 = vld [vmem:[#allocation5 + $0x310] sm:$0xff]
    %v158 = vld [vmem:[#allocation5 + $0x318] sm:$0xff]
    %v159 = vld [vmem:[#allocation5 + $0x320] sm:$0xff]
    %v160 = vld [vmem:[#allocation5 + $0x328] sm:$0xff]
    %v161 = vld [vmem:[#allocation5 + $0x330] sm:$0xff]
    %v162 = vld [vmem:[#allocation5 + $0x338] sm:$0xff]
    %v163 = vld [vmem:[#allocation5 + $0x340] sm:$0xff]
    %v164 = vld [vmem:[#allocation5 + $0x348] sm:$0xff]
    %v165 = vld [vmem:[#allocation5 + $0x350] sm:$0xff]
    %v166 = vld [vmem:[#allocation5 + $0x358] sm:$0xff]
    %v167 = vld [vmem:[#allocation5 + $0x360] sm:$0xff]
    %v168 = vld [vmem:[#allocation5 + $0x368] sm:$0xff]
    %v169 = vld [vmem:[#allocation5 + $0x370] sm:$0xff]
    %v170 = vld [vmem:[#allocation5 + $0x378] sm:$0xff]
    %v171 = vld [vmem:[#allocation5 + $0x380] sm:$0xff]
    %v172 = vld [vmem:[#allocation5 + $0x388] sm:$0xff]
    %v173 = vld [vmem:[#allocation5 + $0x390] sm:$0xff]
    %v174 = vld [vmem:[#allocation5 + $0x398] sm:$0xff]
    %v175 = vld [vmem:[#allocation5 + $0x3a0] sm:$0xff]
    %v176 = vld [vmem:[#allocation5 + $0x3a8] sm:$0xff]
    %v177 = vld [vmem:[#allocation5 + $0x3b0] sm:$0xff]
    %v178 = vld [vmem:[#allocation5 + $0x3b8] sm:$0xff]
    %v179 = vld [vmem:[#allocation5 + $0x3c0] sm:$0xff]
    %v180 = vld [vmem:[#allocation5 + $0x3c8] sm:$0xff]
    %v181 = vld [vmem:[#allocation5 + $0x3d0] sm:$0xff]
    %v182 = vld [vmem:[#allocation5 + $0x3d8] sm:$0xff]
    %v183 = vld [vmem:[#allocation5 + $0x3e0] sm:$0xff]
    %v184 = vld [vmem:[#allocation5 + $0x3e8] sm:$0xff]
    %v185 = vld [vmem:[#allocation5 + $0x3f0] sm:$0xff]
    %v186 = vld [vmem:[#allocation5 + $0x3f8] sm:$0xff]
    %v187 = vld [vmem:[#allocation5 + $0x400] sm:$0xff]
    %v188 = vld [vmem:[#allocation5 + $0x408] sm:$0xff]
    %v189 = vld [vmem:[#allocation5 + $0x410] sm:$0xff]
    %v190 = vld [vmem:[#allocation5 + $0x418] sm:$0xff]
    %v191 = vld [vmem:[#allocation5 + $0x420] sm:$0xff]
    %v192 = vld [vmem:[#allocation5 + $0x428] sm:$0xff]
    %v193 = vld [vmem:[#allocation5 + $0x430] sm:$0xff]
    %v194 = vld [vmem:[#allocation5 + $0x438] sm:$0xff]
    %v195 = vld [vmem:[#allocation5 + $0x440] sm:$0xff]
    %v196 = vld [vmem:[#allocation5 + $0x448] sm:$0xff]
    %v197 = vld [vmem:[#allocation5 + $0x450] sm:$0xff]
    %v198 = vld [vmem:[#allocation5 + $0x458] sm:$0xff]
    %v199 = vld [vmem:[#allocation5 + $0x460] sm:$0xff]
    %v200 = vld [vmem:[#allocation5 + $0x468] sm:$0xff]
    %v201 = vld [vmem:[#allocation5 + $0x470] sm:$0xff]
    %v202 = vld [vmem:[#allocation5 + $0x478] sm:$0xff]
    %v203 = vld [vmem:[#allocation5 + $0x480] sm:$0xff]
    %v204 = vld [vmem:[#allocation5 + $0x488] sm:$0xff]
    %v205 = vld [vmem:[#allocation5 + $0x490] sm:$0xff]
    %v206 = vld [vmem:[#allocation5 + $0x498] sm:$0xff]
    %v207 = vld [vmem:[#allocation5 + $0x4a0] sm:$0xff]
    %v208 = vld [vmem:[#allocation5 + $0x4a8] sm:$0xff]
    %v209 = vld [vmem:[#allocation5 + $0x4b0] sm:$0xff]
    %v210 = vld [vmem:[#allocation5 + $0x4b8] sm:$0xff]
    %v211 = vld [vmem:[#allocation5 + $0x4c0] sm:$0xff]
    %v212 = vld [vmem:[#allocation5 + $0x4c8] sm:$0xff]
    %v213 = vld [vmem:[#allocation5 + $0x4d0] sm:$0xff]
    %v214 = vld [vmem:[#allocation5 + $0x4d8] sm:$0xff]
    %v215 = vld [vmem:[#allocation7] sm:$0x77]
    %v216 = vld [vmem:[#allocation7 + $0x8] sm:$0x77]
    %v217 = vld [vmem:[%s3] sm:$0xff]
    %219 = vset.pattern.permute.xlu0 0
    %220 = vperm.xlu0 %219, %v217
    %v221 = vpop.permute.xlu0 %220
    %v225 = vlaneseq
    %v226 = vshrl.u32 %v225, 7
    %v227 = vsub.s32 0, %v226
    %v228 = vrot.slane %v215, %v227
    %v229 = vlaneseq
    %v230 = vshrl.u32 %v229, 7
    %v231 = vsub.s32 4, %v230
    %v232 = vrot.slane %v215, %v231
    %v233 = vlaneseq
    %v234 = vshrl.u32 %v233, 7
    %v235 = vsub.s32 0, %v234
    %v236 = vrot.slane %v216, %v235
    %v237 = vlaneseq
    %v238 = vshrl.u32 %v237, 7
    %v239 = vsub.s32 4, %v238
    %v240 = vrot.slane %v216, %v239
    %v245 = vlaneseq
    %v246 = vshrl.u32 %v245, 7
    %v247 = vsub.s32 0, %v246
    %v248 = vrot.slane %v228, %v247
    %v249 = vlaneseq
    %v250 = vshrl.u32 %v249, 7
    %v251 = vsub.s32 0, %v250
    %v252 = vrot.slane %v232, %v251
    %v253 = vlaneseq
    %v254 = vshrl.u32 %v253, 7
    %v255 = vsub.s32 0, %v254
    %v256 = vrot.slane %v236, %v255
    %v257 = vlaneseq
    %v258 = vshrl.u32 %v257, 7
    %v259 = vsub.s32 0, %v258
    %v260 = vrot.slane %v240, %v259
    %v261 = vmul.f32 %v221, %v248
    %v262 = vmul.f32 %v221, %v252
    %v263 = vmul.f32 %v221, %v256
    %v264 = vmul.f32 %v221, %v260
    %265 = vset.pattern.permute.xlu0 1
    %266 = vperm.xlu0 %265, %v217
    %v267 = vpop.permute.xlu0 %266
    %v269 = vlaneseq
    %v270 = vshrl.u32 %v269, 7
    %v271 = vsub.s32 1, %v270
    %v272 = vrot.slane %v215, %v271
    %v273 = vlaneseq
    %v274 = vshrl.u32 %v273, 7
    %v275 = vsub.s32 5, %v274
    %v276 = vrot.slane %v215, %v275
    %v277 = vlaneseq
    %v278 = vshrl.u32 %v277, 7
    %v279 = vsub.s32 1, %v278
    %v280 = vrot.slane %v216, %v279
    %v281 = vlaneseq
    %v282 = vshrl.u32 %v281, 7
    %v283 = vsub.s32 5, %v282
    %v284 = vrot.slane %v216, %v283
    %v289 = vlaneseq
    %v290 = vshrl.u32 %v289, 7
    %v291 = vsub.s32 1, %v290
    %v292 = vrot.slane %v272, %v291
    %v293 = vlaneseq
    %v294 = vshrl.u32 %v293, 7
    %v295 = vsub.s32 1, %v294
    %v296 = vrot.slane %v276, %v295
    %v297 = vlaneseq
    %v298 = vshrl.u32 %v297, 7
    %v299 = vsub.s32 1, %v298
    %v300 = vrot.slane %v280, %v299
    %v301 = vlaneseq
    %v302 = vshrl.u32 %v301, 7
    %v303 = vsub.s32 1, %v302
    %v304 = vrot.slane %v284, %v303
    %v305 = vmul.f32 %v267, %v292
    %v306 = vmul.f32 %v267, %v296
    %v307 = vmul.f32 %v267, %v300
    %v308 = vmul.f32 %v267, %v304
    %v309 = vadd.f32 %v261, %v305
    %v310 = vadd.f32 %v262, %v306
    %v311 = vadd.f32 %v263, %v307
    %v312 = vadd.f32 %v264, %v308
    %313 = vset.pattern.permute.xlu0 2
    %314 = vperm.xlu0 %313, %v217
    %v315 = vpop.permute.xlu0 %314
    %v317 = vlaneseq
    %v318 = vshrl.u32 %v317, 7
    %v319 = vsub.s32 2, %v318
    %v320 = vrot.slane %v215, %v319
    %v321 = vlaneseq
    %v322 = vshrl.u32 %v321, 7
    %v323 = vsub.s32 6, %v322
    %v324 = vrot.slane %v215, %v323
    %v325 = vlaneseq
    %v326 = vshrl.u32 %v325, 7
    %v327 = vsub.s32 2, %v326
    %v328 = vrot.slane %v216, %v327
    %v329 = vlaneseq
    %v330 = vshrl.u32 %v329, 7
    %v331 = vsub.s32 6, %v330
    %v332 = vrot.slane %v216, %v331
    %v337 = vlaneseq
    %v338 = vshrl.u32 %v337, 7
    %v339 = vsub.s32 2, %v338
    %v340 = vrot.slane %v320, %v339
    %v341 = vlaneseq
    %v342 = vshrl.u32 %v341, 7
    %v343 = vsub.s32 2, %v342
    %v344 = vrot.slane %v324, %v343
    %v345 = vlaneseq
    %v346 = vshrl.u32 %v345, 7
    %v347 = vsub.s32 2, %v346
    %v348 = vrot.slane %v328, %v347
    %v349 = vlaneseq
    %v350 = vshrl.u32 %v349, 7
    %v351 = vsub.s32 2, %v350
    %v352 = vrot.slane %v332, %v351
    %v353 = vmul.f32 %v315, %v340
    %v354 = vmul.f32 %v315, %v344
    %v355 = vmul.f32 %v315, %v348
    %v356 = vmul.f32 %v315, %v352
    %v357 = vadd.f32 %v309, %v353
    %v358 = vadd.f32 %v310, %v354
    %v359 = vadd.f32 %v311, %v355
    %v360 = vadd.f32 %v312, %v356
    %361 = vset.pattern.permute.xlu0 3
    %362 = vperm.xlu0 %361, %v217
    %v363 = vpop.permute.xlu0 %362
    %v365 = vadd.f32 %v357, %v363
    %v366 = vadd.f32 %v358, %v363
    %v367 = vadd.f32 %v359, %v363
    %v368 = vadd.f32 %v360, %v363
    %v372 = vunpack.c.l.b16 %v56
    %v373 = vunpack.c.h.b16 %v56
    %v374 = vunpack.c.l.b16 %v57
    %v375 = vunpack.c.h.b16 %v57
    %v376 = vunpack.c.l.b16 %v58
    %v377 = vpack.c.b16 %v372, %v372
    %v378 = vpack.c.b16 %v373, %v373
    %v379 = vpack.c.b16 %v374, %v374
    %v380 = vpack.c.b16 %v375, %v375
    %v381 = vpack.c.b16 %v376, %v376
    %v542 = vunpack.c.l.b16 %v59
    %v543 = vunpack.c.h.b16 %v59
    %v544 = vunpack.c.l.b16 %v60
    %v545 = vunpack.c.h.b16 %v60
    %v546 = vunpack.c.l.b16 %v61
    %v547 = vunpack.c.h.b16 %v61
    %v548 = vunpack.c.l.b16 %v62
    %v549 = vunpack.c.h.b16 %v62
    %v550 = vunpack.c.l.b16 %v63
    %v551 = vunpack.c.h.b16 %v63
    %v552 = vunpack.c.l.b16 %v64
    %v553 = vunpack.c.h.b16 %v64
    %v554 = vunpack.c.l.b16 %v65
    %v555 = vunpack.c.h.b16 %v65
    %v556 = vunpack.c.l.b16 %v66
    %v557 = vunpack.c.h.b16 %v66
    %v558 = vunpack.c.l.b16 %v67
    %v559 = vunpack.c.h.b16 %v67
    %v560 = vunpack.c.l.b16 %v68
    %v561 = vunpack.c.h.b16 %v68
    %v562 = vunpack.c.l.b16 %v69
    %v563 = vunpack.c.h.b16 %v69
    %v564 = vunpack.c.l.b16 %v70
    %v565 = vunpack.c.h.b16 %v70
    %v566 = vunpack.c.l.b16 %v71
    %v567 = vunpack.c.h.b16 %v71
    %v568 = vunpack.c.l.b16 %v72
    %v569 = vunpack.c.h.b16 %v72
    %v570 = vunpack.c.l.b16 %v73
    %v571 = vunpack.c.h.b16 %v73
    %v572 = vunpack.c.l.b16 %v74
    %v573 = vunpack.c.h.b16 %v74
    %v574 = vunpack.c.l.b16 %v75
    %v575 = vunpack.c.h.b16 %v75
    %v576 = vunpack.c.l.b16 %v76
    %v577 = vunpack.c.h.b16 %v76
    %v578 = vunpack.c.l.b16 %v77
    %v579 = vunpack.c.h.b16 %v77
    %v580 = vunpack.c.l.b16 %v78
    %v581 = vunpack.c.h.b16 %v78
    %v582 = vunpack.c.l.b16 %v79
    %v583 = vunpack.c.h.b16 %v79
    %v584 = vunpack.c.l.b16 %v80
    %v585 = vunpack.c.h.b16 %v80
    %v586 = vunpack.c.l.b16 %v81
    %v587 = vunpack.c.h.b16 %v81
    %v588 = vunpack.c.l.b16 %v82
    %v589 = vunpack.c.h.b16 %v82
    %v590 = vunpack.c.l.b16 %v83
    %v591 = vunpack.c.h.b16 %v83
    %v592 = vunpack.c.l.b16 %v84
    %v593 = vunpack.c.h.b16 %v84
    %v594 = vunpack.c.l.b16 %v85
    %v595 = vunpack.c.h.b16 %v85
    %v596 = vunpack.c.l.b16 %v86
    %v597 = vunpack.c.h.b16 %v86
    %v598 = vunpack.c.l.b16 %v87
    %v599 = vunpack.c.h.b16 %v87
    %v600 = vunpack.c.l.b16 %v88
    %v601 = vunpack.c.h.b16 %v88
    %v602 = vunpack.c.l.b16 %v89
    %v603 = vunpack.c.h.b16 %v89
    %v604 = vunpack.c.l.b16 %v90
    %v605 = vunpack.c.h.b16 %v90
    %v606 = vunpack.c.l.b16 %v91
    %v607 = vunpack.c.h.b16 %v91
    %v608 = vunpack.c.l.b16 %v92
    %v609 = vunpack.c.h.b16 %v92
    %v610 = vunpack.c.l.b16 %v93
    %v611 = vunpack.c.h.b16 %v93
    %v612 = vunpack.c.l.b16 %v94
    %v613 = vunpack.c.h.b16 %v94
    %v614 = vunpack.c.l.b16 %v95
    %v615 = vunpack.c.h.b16 %v95
    %v616 = vunpack.c.l.b16 %v96
    %v617 = vunpack.c.h.b16 %v96
    %v618 = vunpack.c.l.b16 %v97
    %v619 = vunpack.c.h.b16 %v97
    %v620 = vunpack.c.l.b16 %v98
    %v621 = vunpack.c.h.b16 %v98
    %v622 = vunpack.c.l.b16 %v99
    %v623 = vunpack.c.h.b16 %v99
    %v624 = vunpack.c.l.b16 %v100
    %v625 = vunpack.c.h.b16 %v100
    %v626 = vunpack.c.l.b16 %v101
    %v627 = vunpack.c.h.b16 %v101
    %v628 = vunpack.c.l.b16 %v102
    %v629 = vunpack.c.h.b16 %v102
    %v630 = vunpack.c.l.b16 %v103
    %v631 = vunpack.c.h.b16 %v103
    %v632 = vunpack.c.l.b16 %v104
    %v633 = vunpack.c.h.b16 %v104
    %v634 = vunpack.c.l.b16 %v105
    %v635 = vunpack.c.h.b16 %v105
    %v636 = vunpack.c.l.b16 %v106
    %v637 = vunpack.c.h.b16 %v106
    %v638 = vunpack.c.l.b16 %v107
    %v639 = vunpack.c.h.b16 %v107
    %v640 = vunpack.c.l.b16 %v108
    %v641 = vunpack.c.h.b16 %v108
    %v642 = vunpack.c.l.b16 %v109
    %v643 = vunpack.c.h.b16 %v109
    %v644 = vunpack.c.l.b16 %v110
    %v645 = vunpack.c.h.b16 %v110
    %v646 = vunpack.c.l.b16 %v111
    %v647 = vunpack.c.h.b16 %v111
    %v648 = vunpack.c.l.b16 %v112
    %v649 = vunpack.c.h.b16 %v112
    %v650 = vunpack.c.l.b16 %v113
    %v651 = vunpack.c.h.b16 %v113
    %v652 = vunpack.c.l.b16 %v114
    %v653 = vunpack.c.h.b16 %v114
    %v654 = vunpack.c.l.b16 %v115
    %v655 = vunpack.c.h.b16 %v115
    %v656 = vunpack.c.l.b16 %v116
    %v657 = vunpack.c.h.b16 %v116
    %v658 = vunpack.c.l.b16 %v117
    %v659 = vunpack.c.h.b16 %v117
    %v660 = vunpack.c.l.b16 %v118
    %v661 = vunpack.c.h.b16 %v118
    %v662 = vunpack.c.l.b16 %v119
    %v663 = vunpack.c.h.b16 %v119
    %v664 = vunpack.c.l.b16 %v120
    %v665 = vunpack.c.h.b16 %v120
    %v666 = vunpack.c.l.b16 %v121
    %v667 = vunpack.c.h.b16 %v121
    %v668 = vunpack.c.l.b16 %v122
    %v669 = vunpack.c.h.b16 %v122
    %v670 = vunpack.c.l.b16 %v123
    %v671 = vunpack.c.h.b16 %v123
    %v672 = vunpack.c.l.b16 %v124
    %v673 = vunpack.c.h.b16 %v124
    %v674 = vunpack.c.l.b16 %v125
    %v675 = vunpack.c.h.b16 %v125
    %v676 = vunpack.c.l.b16 %v126
    %v677 = vunpack.c.h.b16 %v126
    %v678 = vunpack.c.l.b16 %v127
    %v679 = vunpack.c.h.b16 %v127
    %v680 = vunpack.c.l.b16 %v128
    %v681 = vunpack.c.h.b16 %v128
    %v682 = vunpack.c.l.b16 %v129
    %v683 = vunpack.c.h.b16 %v129
    %v684 = vunpack.c.l.b16 %v130
    %v685 = vunpack.c.h.b16 %v130
    %v686 = vunpack.c.l.b16 %v131
    %v687 = vunpack.c.h.b16 %v131
    %v688 = vunpack.c.l.b16 %v132
    %v689 = vunpack.c.h.b16 %v132
    %v690 = vunpack.c.l.b16 %v133
    %v691 = vunpack.c.h.b16 %v133
    %v692 = vunpack.c.l.b16 %v134
    %v693 = vunpack.c.h.b16 %v134
    %v694 = vunpack.c.l.b16 %v135
    %v695 = vunpack.c.h.b16 %v135
    %v696 = vunpack.c.l.b16 %v136
    %v697 = vunpack.c.h.b16 %v136
    %v698 = vunpack.c.l.b16 %v137
    %v699 = vunpack.c.h.b16 %v137
    %v700 = vunpack.c.l.b16 %v138
    %v701 = vunpack.c.h.b16 %v138
    %v702 = vunpack.c.l.b16 %v139
    %v703 = vunpack.c.h.b16 %v139
    %v704 = vunpack.c.l.b16 %v140
    %v705 = vunpack.c.h.b16 %v140
    %v706 = vunpack.c.l.b16 %v141
    %v707 = vunpack.c.h.b16 %v141
    %v708 = vunpack.c.l.b16 %v142
    %v709 = vunpack.c.h.b16 %v142
    %v710 = vunpack.c.l.b16 %v143
    %v711 = vunpack.c.h.b16 %v143
    %v712 = vunpack.c.l.b16 %v144
    %v713 = vunpack.c.h.b16 %v144
    %v714 = vunpack.c.l.b16 %v145
    %v715 = vunpack.c.h.b16 %v145
    %v716 = vunpack.c.l.b16 %v146
    %v717 = vunpack.c.h.b16 %v146
    %v718 = vunpack.c.l.b16 %v147
    %v719 = vunpack.c.h.b16 %v147
    %v720 = vunpack.c.l.b16 %v148
    %v721 = vunpack.c.h.b16 %v148
    %v722 = vunpack.c.l.b16 %v149
    %v723 = vunpack.c.h.b16 %v149
    %v724 = vunpack.c.l.b16 %v150
    %v725 = vunpack.c.h.b16 %v150
    %v726 = vunpack.c.l.b16 %v151
    %v727 = vunpack.c.h.b16 %v151
    %v728 = vunpack.c.l.b16 %v152
    %v729 = vunpack.c.h.b16 %v152
    %v730 = vunpack.c.l.b16 %v153
    %v731 = vunpack.c.h.b16 %v153
    %v732 = vunpack.c.l.b16 %v154
    %v733 = vunpack.c.h.b16 %v154
    %v734 = vunpack.c.l.b16 %v155
    %v735 = vunpack.c.h.b16 %v155
    %v736 = vunpack.c.l.b16 %v156
    %v737 = vunpack.c.h.b16 %v156
    %v738 = vunpack.c.l.b16 %v157
    %v739 = vunpack.c.h.b16 %v157
    %v740 = vunpack.c.l.b16 %v158
    %v741 = vunpack.c.h.b16 %v158
    %v742 = vunpack.c.l.b16 %v159
    %v743 = vunpack.c.h.b16 %v159
    %v744 = vunpack.c.l.b16 %v160
    %v745 = vunpack.c.h.b16 %v160
    %v746 = vunpack.c.l.b16 %v161
    %v747 = vunpack.c.h.b16 %v161
    %v748 = vunpack.c.l.b16 %v162
    %v749 = vunpack.c.h.b16 %v162
    %v750 = vunpack.c.l.b16 %v163
    %v751 = vunpack.c.h.b16 %v163
    %v752 = vunpack.c.l.b16 %v164
    %v753 = vunpack.c.h.b16 %v164
    %v754 = vunpack.c.l.b16 %v165
    %v755 = vunpack.c.h.b16 %v165
    %v756 = vunpack.c.l.b16 %v166
    %v757 = vunpack.c.h.b16 %v166
    %v758 = vunpack.c.l.b16 %v167
    %v759 = vunpack.c.h.b16 %v167
    %v760 = vunpack.c.l.b16 %v168
    %v761 = vunpack.c.h.b16 %v168
    %v762 = vunpack.c.l.b16 %v169
    %v763 = vunpack.c.h.b16 %v169
    %v764 = vunpack.c.l.b16 %v170
    %v765 = vunpack.c.h.b16 %v170
    %v766 = vunpack.c.l.b16 %v171
    %v767 = vunpack.c.h.b16 %v171
    %v768 = vunpack.c.l.b16 %v172
    %v769 = vunpack.c.h.b16 %v172
    %v770 = vunpack.c.l.b16 %v173
    %v771 = vunpack.c.h.b16 %v173
    %v772 = vunpack.c.l.b16 %v174
    %v773 = vunpack.c.h.b16 %v174
    %v774 = vunpack.c.l.b16 %v175
    %v775 = vunpack.c.h.b16 %v175
    %v776 = vunpack.c.l.b16 %v176
    %v777 = vunpack.c.h.b16 %v176
    %v778 = vunpack.c.l.b16 %v177
    %v779 = vunpack.c.h.b16 %v177
    %v780 = vunpack.c.l.b16 %v178
    %v781 = vunpack.c.h.b16 %v178
    %v782 = vunpack.c.l.b16 %v179
    %v783 = vunpack.c.h.b16 %v179
    %v784 = vunpack.c.l.b16 %v180
    %v785 = vunpack.c.h.b16 %v180
    %v786 = vunpack.c.l.b16 %v181
    %v787 = vunpack.c.h.b16 %v181
    %v788 = vunpack.c.l.b16 %v182
    %v789 = vunpack.c.h.b16 %v182
    %v790 = vunpack.c.l.b16 %v183
    %v791 = vunpack.c.h.b16 %v183
    %v792 = vunpack.c.l.b16 %v184
    %v793 = vunpack.c.h.b16 %v184
    %v794 = vunpack.c.l.b16 %v185
    %v795 = vunpack.c.h.b16 %v185
    %v796 = vunpack.c.l.b16 %v186
    %v797 = vunpack.c.h.b16 %v186
    %v798 = vunpack.c.l.b16 %v187
    %v799 = vunpack.c.h.b16 %v187
    %v800 = vunpack.c.l.b16 %v188
    %v801 = vunpack.c.h.b16 %v188
    %v802 = vunpack.c.l.b16 %v189
    %v803 = vunpack.c.h.b16 %v189
    %v804 = vunpack.c.l.b16 %v190
    %v805 = vunpack.c.h.b16 %v190
    %v806 = vunpack.c.l.b16 %v191
    %v807 = vunpack.c.h.b16 %v191
    %v808 = vunpack.c.l.b16 %v192
    %v809 = vunpack.c.h.b16 %v192
    %v810 = vunpack.c.l.b16 %v193
    %v811 = vunpack.c.h.b16 %v193
    %v812 = vunpack.c.l.b16 %v194
    %v813 = vunpack.c.h.b16 %v194
    %v814 = vunpack.c.l.b16 %v195
    %v815 = vunpack.c.h.b16 %v195
    %v816 = vunpack.c.l.b16 %v196
    %v817 = vunpack.c.h.b16 %v196
    %v818 = vunpack.c.l.b16 %v197
    %v819 = vunpack.c.h.b16 %v197
    %v820 = vunpack.c.l.b16 %v198
    %v821 = vunpack.c.h.b16 %v198
    %v822 = vunpack.c.l.b16 %v199
    %v823 = vunpack.c.h.b16 %v199
    %v824 = vunpack.c.l.b16 %v200
    %v825 = vunpack.c.h.b16 %v200
    %v826 = vunpack.c.l.b16 %v201
    %v827 = vunpack.c.h.b16 %v201
    %v828 = vunpack.c.l.b16 %v202
    %v829 = vunpack.c.h.b16 %v202
    %v830 = vunpack.c.l.b16 %v203
    %v831 = vunpack.c.h.b16 %v203
    %v832 = vunpack.c.l.b16 %v204
    %v833 = vunpack.c.h.b16 %v204
    %v834 = vunpack.c.l.b16 %v205
    %v835 = vunpack.c.h.b16 %v205
    %v836 = vunpack.c.l.b16 %v206
    %v837 = vunpack.c.h.b16 %v206
    %v838 = vunpack.c.l.b16 %v207
    %v839 = vunpack.c.h.b16 %v207
    %v840 = vunpack.c.l.b16 %v208
    %v841 = vunpack.c.h.b16 %v208
    %v842 = vunpack.c.l.b16 %v209
    %v843 = vunpack.c.h.b16 %v209
    %v844 = vunpack.c.l.b16 %v210
    %v845 = vunpack.c.h.b16 %v210
    %v846 = vunpack.c.l.b16 %v211
    %v847 = vunpack.c.h.b16 %v211
    %v848 = vunpack.c.l.b16 %v212
    %v849 = vunpack.c.h.b16 %v212
    %v850 = vunpack.c.l.b16 %v213
    %v851 = vunpack.c.h.b16 %v213
    %v852 = vunpack.c.l.b16 %v214
    %v853 = vunpack.c.h.b16 %v214
    %v854 = vpack.c.b16 %v546, %v542
    %v855 = vpack.c.b16 %v547, %v543
    %v856 = vpack.c.b16 %v548, %v544
    %v857 = vpack.c.b16 %v549, %v545
    %v858 = vpack.c.b16 %v554, %v550
    %v859 = vpack.c.b16 %v555, %v551
    %v860 = vpack.c.b16 %v556, %v552
    %v861 = vpack.c.b16 %v557, %v553
    %v862 = vpack.c.b16 %v562, %v558
    %v863 = vpack.c.b16 %v563, %v559
    %v864 = vpack.c.b16 %v564, %v560
    %v865 = vpack.c.b16 %v565, %v561
    %v866 = vpack.c.b16 %v570, %v566
    %v867 = vpack.c.b16 %v571, %v567
    %v868 = vpack.c.b16 %v572, %v568
    %v869 = vpack.c.b16 %v573, %v569
    %v870 = vpack.c.b16 %v578, %v574
    %v871 = vpack.c.b16 %v579, %v575
    %v872 = vpack.c.b16 %v580, %v576
    %v873 = vpack.c.b16 %v581, %v577
    %v874 = vpack.c.b16 %v586, %v582
    %v875 = vpack.c.b16 %v587, %v583
    %v876 = vpack.c.b16 %v588, %v584
    %v877 = vpack.c.b16 %v589, %v585
    %v878 = vpack.c.b16 %v594, %v590
    %v879 = vpack.c.b16 %v595, %v591
    %v880 = vpack.c.b16 %v596, %v592
    %v881 = vpack.c.b16 %v597, %v593
    %v882 = vpack.c.b16 %v602, %v598
    %v883 = vpack.c.b16 %v603, %v599
    %v884 = vpack.c.b16 %v604, %v600
    %v885 = vpack.c.b16 %v605, %v601
    %v886 = vpack.c.b16 %v610, %v606
    %v887 = vpack.c.b16 %v611, %v607
    %v888 = vpack.c.b16 %v612, %v608
    %v889 = vpack.c.b16 %v613, %v609
    %v890 = vpack.c.b16 %v618, %v614
    %v891 = vpack.c.b16 %v619, %v615
    %v892 = vpack.c.b16 %v620, %v616
    %v893 = vpack.c.b16 %v621, %v617
    %v894 = vpack.c.b16 %v626, %v622
    %v895 = vpack.c.b16 %v627, %v623
    %v896 = vpack.c.b16 %v628, %v624
    %v897 = vpack.c.b16 %v629, %v625
    %v898 = vpack.c.b16 %v634, %v630
    %v899 = vpack.c.b16 %v635, %v631
    %v900 = vpack.c.b16 %v636, %v632
    %v901 = vpack.c.b16 %v637, %v633
    %v902 = vpack.c.b16 %v642, %v638
    %v903 = vpack.c.b16 %v643, %v639
    %v904 = vpack.c.b16 %v644, %v640
    %v905 = vpack.c.b16 %v645, %v641
    %v906 = vpack.c.b16 %v650, %v646
    %v907 = vpack.c.b16 %v651, %v647
    %v908 = vpack.c.b16 %v652, %v648
    %v909 = vpack.c.b16 %v653, %v649
    %v910 = vpack.c.b16 %v658, %v654
    %v911 = vpack.c.b16 %v659, %v655
    %v912 = vpack.c.b16 %v660, %v656
    %v913 = vpack.c.b16 %v661, %v657
    %v914 = vpack.c.b16 %v666, %v662
    %v915 = vpack.c.b16 %v667, %v663
    %v916 = vpack.c.b16 %v668, %v664
    %v917 = vpack.c.b16 %v669, %v665
    %v918 = vpack.c.b16 %v674, %v670
    %v919 = vpack.c.b16 %v675, %v671
    %v920 = vpack.c.b16 %v676, %v672
    %v921 = vpack.c.b16 %v677, %v673
    %v922 = vpack.c.b16 %v682, %v678
    %v923 = vpack.c.b16 %v683, %v679
    %v924 = vpack.c.b16 %v684, %v680
    %v925 = vpack.c.b16 %v685, %v681
    %v926 = vpack.c.b16 %v690, %v686
    %v927 = vpack.c.b16 %v691, %v687
    %v928 = vpack.c.b16 %v692, %v688
    %v929 = vpack.c.b16 %v693, %v689
    %v930 = vpack.c.b16 %v698, %v694
    %v931 = vpack.c.b16 %v699, %v695
    %v932 = vpack.c.b16 %v700, %v696
    %v933 = vpack.c.b16 %v701, %v697
    %v934 = vpack.c.b16 %v706, %v702
    %v935 = vpack.c.b16 %v707, %v703
    %v936 = vpack.c.b16 %v708, %v704
    %v937 = vpack.c.b16 %v709, %v705
    %v938 = vpack.c.b16 %v714, %v710
    %v939 = vpack.c.b16 %v715, %v711
    %v940 = vpack.c.b16 %v716, %v712
    %v941 = vpack.c.b16 %v717, %v713
    %v942 = vpack.c.b16 %v722, %v718
    %v943 = vpack.c.b16 %v723, %v719
    %v944 = vpack.c.b16 %v724, %v720
    %v945 = vpack.c.b16 %v725, %v721
    %v946 = vpack.c.b16 %v730, %v726
    %v947 = vpack.c.b16 %v731, %v727
    %v948 = vpack.c.b16 %v732, %v728
    %v949 = vpack.c.b16 %v733, %v729
    %v950 = vpack.c.b16 %v738, %v734
    %v951 = vpack.c.b16 %v739, %v735
    %v952 = vpack.c.b16 %v740, %v736
    %v953 = vpack.c.b16 %v741, %v737
    %v954 = vpack.c.b16 %v746, %v742
    %v955 = vpack.c.b16 %v747, %v743
    %v956 = vpack.c.b16 %v748, %v744
    %v957 = vpack.c.b16 %v749, %v745
    %v958 = vpack.c.b16 %v754, %v750
    %v959 = vpack.c.b16 %v755, %v751
    %v960 = vpack.c.b16 %v756, %v752
    %v961 = vpack.c.b16 %v757, %v753
    %v962 = vpack.c.b16 %v762, %v758
    %v963 = vpack.c.b16 %v763, %v759
    %v964 = vpack.c.b16 %v764, %v760
    %v965 = vpack.c.b16 %v765, %v761
    %v966 = vpack.c.b16 %v770, %v766
    %v967 = vpack.c.b16 %v771, %v767
    %v968 = vpack.c.b16 %v772, %v768
    %v969 = vpack.c.b16 %v773, %v769
    %v970 = vpack.c.b16 %v778, %v774
    %v971 = vpack.c.b16 %v779, %v775
    %v972 = vpack.c.b16 %v780, %v776
    %v973 = vpack.c.b16 %v781, %v777
    %v974 = vpack.c.b16 %v786, %v782
    %v975 = vpack.c.b16 %v787, %v783
    %v976 = vpack.c.b16 %v788, %v784
    %v977 = vpack.c.b16 %v789, %v785
    %v978 = vpack.c.b16 %v794, %v790
    %v979 = vpack.c.b16 %v795, %v791
    %v980 = vpack.c.b16 %v796, %v792
    %v981 = vpack.c.b16 %v797, %v793
    %v982 = vpack.c.b16 %v802, %v798
    %v983 = vpack.c.b16 %v803, %v799
    %v984 = vpack.c.b16 %v804, %v800
    %v985 = vpack.c.b16 %v805, %v801
    %v986 = vpack.c.b16 %v810, %v806
    %v987 = vpack.c.b16 %v811, %v807
    %v988 = vpack.c.b16 %v812, %v808
    %v989 = vpack.c.b16 %v813, %v809
    %v990 = vpack.c.b16 %v818, %v814
    %v991 = vpack.c.b16 %v819, %v815
    %v992 = vpack.c.b16 %v820, %v816
    %v993 = vpack.c.b16 %v821, %v817
    %v994 = vpack.c.b16 %v826, %v822
    %v995 = vpack.c.b16 %v827, %v823
    %v996 = vpack.c.b16 %v828, %v824
    %v997 = vpack.c.b16 %v829, %v825
    %v998 = vpack.c.b16 %v834, %v830
    %v999 = vpack.c.b16 %v835, %v831
    %v1000 = vpack.c.b16 %v836, %v832
    %v1001 = vpack.c.b16 %v837, %v833
    %v1002 = vpack.c.b16 %v842, %v838
    %v1003 = vpack.c.b16 %v843, %v839
    %v1004 = vpack.c.b16 %v844, %v840
    %v1005 = vpack.c.b16 %v845, %v841
    %v1006 = vpack.c.b16 %v850, %v846
    %v1007 = vpack.c.b16 %v851, %v847
    %v1008 = vpack.c.b16 %v852, %v848
    %v1009 = vpack.c.b16 %v853, %v849
    %vm1166 = vcmask 916480
    %v1168 = vsel %vm1166, %v381, 0
    %1170 = vmatprep.subr.bf16.mxu0 %v883
    %1171 = vmatpush1.bf16.msra.mxu0 %v882
    %1172 = vmatprep.subr.bf16.mxu0 %v879
    %1173 = vmatpush1.bf16.msra.mxu0 %v878
    %1174 = vmatprep.subr.bf16.mxu0 %v875
    %1175 = vmatpush1.bf16.msra.mxu0 %v874
    %1176 = vmatprep.subr.bf16.mxu0 %v871
    %1177 = vmatpush1.bf16.msra.mxu0 %v870
    %1178 = vmatprep.subr.bf16.mxu0 %v867
    %1179 = vmatpush1.bf16.msra.mxu0 %v866
    %1180 = vmatprep.subr.bf16.mxu0 %v863
    %1181 = vmatpush1.bf16.msra.mxu0 %v862
    %1182 = vmatprep.subr.bf16.mxu0 %v859
    %1183 = vmatpush1.bf16.msra.mxu0 %v858
    %1184 = vmatprep.subr.bf16.mxu0 %v855
    %1185 = vmatpush1.bf16.msra.mxu0 %v854
    %1186 = vmatprep.subr.bf16.mxu0 %v915
    %1187 = vmatpush2.bf16.msra.mxu0 %v914
    %1188 = vmatprep.subr.bf16.mxu0 %v911
    %1189 = vmatpush2.bf16.msra.mxu0 %v910
    %1190 = vmatprep.subr.bf16.mxu0 %v907
    %1191 = vmatpush2.bf16.msra.mxu0 %v906
    %1192 = vmatprep.subr.bf16.mxu0 %v903
    %1193 = vmatpush2.bf16.msra.mxu0 %v902
    %1194 = vmatprep.subr.bf16.mxu0 %v899
    %1195 = vmatpush2.bf16.msra.mxu0 %v898
    %1196 = vmatprep.subr.bf16.mxu0 %v895
    %1197 = vmatpush2.bf16.msra.mxu0 %v894
    %1198 = vmatprep.subr.bf16.mxu0 %v891
    %1199 = vmatpush2.bf16.msra.mxu0 %v890
    %1200 = vmatprep.subr.bf16.mxu0 %v887
    %1201 = vmatpush2.bf16.msra.mxu0 %v886
    %1202 = vmatprep.mubr.bf16.mxu0 %v378
    %1203 = vmatmul.mubr.bf16.gmra.mxu0 %v377
    %v1204 = vpop.f32.mrf.mxu0
    %v1205 = vadd.f32 %v365, %v1204
    %v1206 = vpop.f32.mrf.mxu0
    %v1207 = vadd.f32 %v366, %v1206
    %v1208 = vpop.f32.mrf.mxu0
    %v1209 = vpop.f32.mrf.mxu0
    %1210 = vdwg.mxu0
    %1211 = vmatprep.subr.bf16.mxu0 %v947
    %1212 = vmatpush1.bf16.msra.mxu0 %v946
    %1213 = vmatprep.subr.bf16.mxu0 %v943
    %1214 = vmatpush1.bf16.msra.mxu0 %v942
    %1215 = vmatprep.subr.bf16.mxu0 %v939
    %1216 = vmatpush1.bf16.msra.mxu0 %v938
    %1217 = vmatprep.subr.bf16.mxu0 %v935
    %1218 = vmatpush1.bf16.msra.mxu0 %v934
    %1219 = vmatprep.subr.bf16.mxu0 %v931
    %1220 = vmatpush1.bf16.msra.mxu0 %v930
    %1221 = vmatprep.subr.bf16.mxu0 %v927
    %1222 = vmatpush1.bf16.msra.mxu0 %v926
    %1223 = vmatprep.subr.bf16.mxu0 %v923
    %1224 = vmatpush1.bf16.msra.mxu0 %v922
    %1225 = vmatprep.subr.bf16.mxu0 %v919
    %1226 = vmatpush1.bf16.msra.mxu0 %v918
    %1227 = vmatprep.subr.bf16.mxu0 %v979
    %1228 = vmatpush2.bf16.msra.mxu0 %v978
    %1229 = vmatprep.subr.bf16.mxu0 %v975
    %1230 = vmatpush2.bf16.msra.mxu0 %v974
    %1231 = vmatprep.subr.bf16.mxu0 %v971
    %1232 = vmatpush2.bf16.msra.mxu0 %v970
    %1233 = vmatprep.subr.bf16.mxu0 %v967
    %1234 = vmatpush2.bf16.msra.mxu0 %v966
    %1235 = vmatprep.subr.bf16.mxu0 %v963
    %1236 = vmatpush2.bf16.msra.mxu0 %v962
    %1237 = vmatprep.subr.bf16.mxu0 %v959
    %1238 = vmatpush2.bf16.msra.mxu0 %v958
    %1239 = vmatprep.subr.bf16.mxu0 %v955
    %1240 = vmatpush2.bf16.msra.mxu0 %v954
    %1241 = vmatprep.subr.bf16.mxu0 %v951
    %1242 = vmatpush2.bf16.msra.mxu0 %v950
    %1243 = vmatprep.mubr.bf16.mxu0 %v380
    %1244 = vmatmul.mubr.bf16.gmra.mxu0 %v379
    %v1245 = vpop.f32.mrf.mxu0
    %v1246 = vadd.f32 %v1205, %v1245
    %v1247 = vpop.f32.mrf.mxu0
    %v1248 = vadd.f32 %v1207, %v1247
    %v1249 = vpop.f32.mrf.mxu0
    %v1250 = vpop.f32.mrf.mxu0
    %1251 = vdwg.mxu0
    %1252 = vmatprep.subr.bf16.mxu0 0
    %1253 = vmatpush1.bf16.msra.mxu0 0
    %1254 = vmatprep.subr.bf16.mxu0 %v1007
    %1255 = vmatpush1.bf16.msra.mxu0 %v1006
    %1256 = vmatprep.subr.bf16.mxu0 %v1003
    %1257 = vmatpush1.bf16.msra.mxu0 %v1002
    %1258 = vmatprep.subr.bf16.mxu0 %v999
    %1259 = vmatpush1.bf16.msra.mxu0 %v998
    %1260 = vmatprep.subr.bf16.mxu0 %v995
    %1261 = vmatpush1.bf16.msra.mxu0 %v994
    %1262 = vmatprep.subr.bf16.mxu0 %v991
    %1263 = vmatpush1.bf16.msra.mxu0 %v990
    %1264 = vmatprep.subr.bf16.mxu0 %v987
    %1265 = vmatpush1.bf16.msra.mxu0 %v986
    %1266 = vmatprep.subr.bf16.mxu0 %v983
    %1267 = vmatpush1.bf16.msra.mxu0 %v982
    %1268 = vmatprep.subr.bf16.mxu0 0
    %1269 = vmatpush2.bf16.msra.mxu0 0
    %1270 = vmatprep.subr.bf16.mxu0 0
    %1271 = vmatpush2.bf16.msra.mxu0 0
    %1272 = vmatprep.subr.bf16.mxu0 0
    %1273 = vmatpush2.bf16.msra.mxu0 0
    %1274 = vmatprep.subr.bf16.mxu0 0
    %1275 = vmatpush2.bf16.msra.mxu0 0
    %1276 = vmatprep.subr.bf16.mxu0 0
    %1277 = vmatpush2.bf16.msra.mxu0 0
    %1278 = vmatprep.subr.bf16.mxu0 0
    %1279 = vmatpush2.bf16.msra.mxu0 0
    %1280 = vmatprep.subr.bf16.mxu0 0
    %1281 = vmatpush2.bf16.msra.mxu0 0
    %1282 = vmatprep.subr.bf16.mxu0 0
    %1283 = vmatpush2.bf16.msra.mxu0 0
    %1284 = vmatprep.mubr.bf16.mxu0 0
    %1285 = vmatmul.mubr.bf16.gmra.mxu0 %v1168
    %v1286 = vpop.f32.mrf.mxu0
    %v1287 = vadd.f32 %v1246, %v1286
    %v1288 = vpop.f32.mrf.mxu0
    %v1289 = vadd.f32 %v1248, %v1288
    %v1290 = vpop.f32.mrf.mxu0
    %v1291 = vpop.f32.mrf.mxu0
    %1292 = vdwg.mxu0
    %1293 = vmatprep.subr.bf16.mxu0 %v885
    %1294 = vmatpush1.bf16.msra.mxu0 %v884
    %1295 = vmatprep.subr.bf16.mxu0 %v881
    %1296 = vmatpush1.bf16.msra.mxu0 %v880
    %1297 = vmatprep.subr.bf16.mxu0 %v877
    %1298 = vmatpush1.bf16.msra.mxu0 %v876
    %1299 = vmatprep.subr.bf16.mxu0 %v873
    %1300 = vmatpush1.bf16.msra.mxu0 %v872
    %1301 = vmatprep.subr.bf16.mxu0 %v869
    %1302 = vmatpush1.bf16.msra.mxu0 %v868
    %1303 = vmatprep.subr.bf16.mxu0 %v865
    %1304 = vmatpush1.bf16.msra.mxu0 %v864
    %1305 = vmatprep.subr.bf16.mxu0 %v861
    %1306 = vmatpush1.bf16.msra.mxu0 %v860
    %1307 = vmatprep.subr.bf16.mxu0 %v857
    %1308 = vmatpush1.bf16.msra.mxu0 %v856
    %1309 = vmatprep.subr.bf16.mxu0 %v917
    %1310 = vmatpush2.bf16.msra.mxu0 %v916
    %1311 = vmatprep.subr.bf16.mxu0 %v913
    %1312 = vmatpush2.bf16.msra.mxu0 %v912
    %1313 = vmatprep.subr.bf16.mxu0 %v909
    %1314 = vmatpush2.bf16.msra.mxu0 %v908
    %1315 = vmatprep.subr.bf16.mxu0 %v905
    %1316 = vmatpush2.bf16.msra.mxu0 %v904
    %1317 = vmatprep.subr.bf16.mxu0 %v901
    %1318 = vmatpush2.bf16.msra.mxu0 %v900
    %1319 = vmatprep.subr.bf16.mxu0 %v897
    %1320 = vmatpush2.bf16.msra.mxu0 %v896
    %1321 = vmatprep.subr.bf16.mxu0 %v893
    %1322 = vmatpush2.bf16.msra.mxu0 %v892
    %1323 = vmatprep.subr.bf16.mxu0 %v889
    %1324 = vmatpush2.bf16.msra.mxu0 %v888
    %1325 = vmatprep.mubr.bf16.mxu0 %v378
    %1326 = vmatmul.mubr.bf16.gmra.mxu0 %v377
    %v1327 = vpop.f32.mrf.mxu0
    %v1328 = vadd.f32 %v367, %v1327
    %v1329 = vpop.f32.mrf.mxu0
    %v1330 = vadd.f32 %v368, %v1329
    %v1331 = vpop.f32.mrf.mxu0
    %v1332 = vpop.f32.mrf.mxu0
    %1333 = vdwg.mxu0
    %1334 = vmatprep.subr.bf16.mxu0 %v949
    %1335 = vmatpush1.bf16.msra.mxu0 %v948
    %1336 = vmatprep.subr.bf16.mxu0 %v945
    %1337 = vmatpush1.bf16.msra.mxu0 %v944
    %1338 = vmatprep.subr.bf16.mxu0 %v941
    %1339 = vmatpush1.bf16.msra.mxu0 %v940
    %1340 = vmatprep.subr.bf16.mxu0 %v937
    %1341 = vmatpush1.bf16.msra.mxu0 %v936
    %1342 = vmatprep.subr.bf16.mxu0 %v933
    %1343 = vmatpush1.bf16.msra.mxu0 %v932
    %1344 = vmatprep.subr.bf16.mxu0 %v929
    %1345 = vmatpush1.bf16.msra.mxu0 %v928
    %1346 = vmatprep.subr.bf16.mxu0 %v925
    %1347 = vmatpush1.bf16.msra.mxu0 %v924
    %1348 = vmatprep.subr.bf16.mxu0 %v921
    %1349 = vmatpush1.bf16.msra.mxu0 %v920
    %1350 = vmatprep.subr.bf16.mxu0 %v981
    %1351 = vmatpush2.bf16.msra.mxu0 %v980
    %1352 = vmatprep.subr.bf16.mxu0 %v977
    %1353 = vmatpush2.bf16.msra.mxu0 %v976
    %1354 = vmatprep.subr.bf16.mxu0 %v973
    %1355 = vmatpush2.bf16.msra.mxu0 %v972
    %1356 = vmatprep.subr.bf16.mxu0 %v969
    %1357 = vmatpush2.bf16.msra.mxu0 %v968
    %1358 = vmatprep.subr.bf16.mxu0 %v965
    %1359 = vmatpush2.bf16.msra.mxu0 %v964
    %1360 = vmatprep.subr.bf16.mxu0 %v961
    %1361 = vmatpush2.bf16.msra.mxu0 %v960
    %1362 = vmatprep.subr.bf16.mxu0 %v957
    %1363 = vmatpush2.bf16.msra.mxu0 %v956
    %1364 = vmatprep.subr.bf16.mxu0 %v953
    %1365 = vmatpush2.bf16.msra.mxu0 %v952
    %1366 = vmatprep.mubr.bf16.mxu0 %v380
    %1367 = vmatmul.mubr.bf16.gmra.mxu0 %v379
    %v1368 = vpop.f32.mrf.mxu0
    %v1369 = vadd.f32 %v1328, %v1368
    %v1370 = vpop.f32.mrf.mxu0
    %v1371 = vadd.f32 %v1330, %v1370
    %v1372 = vpop.f32.mrf.mxu0
    %v1373 = vpop.f32.mrf.mxu0
    %1374 = vdwg.mxu0
    %1375 = vmatprep.subr.bf16.mxu0 0
    %1376 = vmatpush1.bf16.msra.mxu0 0
    %1377 = vmatprep.subr.bf16.mxu0 %v1009
    %1378 = vmatpush1.bf16.msra.mxu0 %v1008
    %1379 = vmatprep.subr.bf16.mxu0 %v1005
    %1380 = vmatpush1.bf16.msra.mxu0 %v1004
    %1381 = vmatprep.subr.bf16.mxu0 %v1001
    %1382 = vmatpush1.bf16.msra.mxu0 %v1000
    %1383 = vmatprep.subr.bf16.mxu0 %v997
    %1384 = vmatpush1.bf16.msra.mxu0 %v996
    %1385 = vmatprep.subr.bf16.mxu0 %v993
    %1386 = vmatpush1.bf16.msra.mxu0 %v992
    %1387 = vmatprep.subr.bf16.mxu0 %v989
    %1388 = vmatpush1.bf16.msra.mxu0 %v988
    %1389 = vmatprep.subr.bf16.mxu0 %v985
    %1390 = vmatpush1.bf16.msra.mxu0 %v984
    %1391 = vmatprep.subr.bf16.mxu0 0
    %1392 = vmatpush2.bf16.msra.mxu0 0
    %1393 = vmatprep.subr.bf16.mxu0 0
    %1394 = vmatpush2.bf16.msra.mxu0 0
    %1395 = vmatprep.subr.bf16.mxu0 0
    %1396 = vmatpush2.bf16.msra.mxu0 0
    %1397 = vmatprep.subr.bf16.mxu0 0
    %1398 = vmatpush2.bf16.msra.mxu0 0
    %1399 = vmatprep.subr.bf16.mxu0 0
    %1400 = vmatpush2.bf16.msra.mxu0 0
    %1401 = vmatprep.subr.bf16.mxu0 0
    %1402 = vmatpush2.bf16.msra.mxu0 0
    %1403 = vmatprep.subr.bf16.mxu0 0
    %1404 = vmatpush2.bf16.msra.mxu0 0
    %1405 = vmatprep.subr.bf16.mxu0 0
    %1406 = vmatpush2.bf16.msra.mxu0 0
    %1407 = vmatprep.mubr.bf16.mxu0 0
    %1408 = vmatmul.mubr.bf16.gmra.mxu0 %v1168
    %v1409 = vpop.f32.mrf.mxu0
    %v1410 = vadd.f32 %v1369, %v1409
    %v1411 = vpop.f32.mrf.mxu0
    %v1412 = vadd.f32 %v1371, %v1411
    %v1413 = vpop.f32.mrf.mxu0
    %v1414 = vpop.f32.mrf.mxu0
    %1415 = vdwg.mxu0
    %1416 = vst [vmem:[#allocation8] sm:$0xff] %v1287
    %1417 = vst [vmem:[#allocation8 + $0x8] sm:$0xff] %v1289
    %1418 = vst [vmem:[#allocation8 + $0x10] sm:$0xff] %v1410
    %1419 = vst [vmem:[#allocation8 + $0x18] sm:$0xff] %v1412
    // Predicated region
    $region30: #{tpu_custom_call.1} parent=1 // pred_check
      _
    $region31: #{tpu_custom_call.1} parent=1 // pred_check_branch
      %1421 = sbr.rel (0) target = $region33
    $region32: #{tpu_custom_call.1} parent=1 // pred_region
      %s1423 = ssub.s32 512, 512
      %1424 = vsyncadd [#allocation4], %s1423
      %s1426 = sshll.u32 [#allocation8], 4
      %s1427 = int_to_ptr.vmem [resolvable:$true] %s1426
      %1429 = dma.vmem_to_hbm [thread:$0]  %s1427, 512, %s4, [#allocation4]
    $region33: #{tpu_custom_call.1} parent=1 // pred_fallthru
      _
    // Predicated region
    $region34: #{tpu_custom_call.1} parent=1 // pred_check
      _
    $region35: #{tpu_custom_call.1} parent=1 // pred_check_branch
      %1431 = sbr.rel (0) target = $region37
    $region36: #{tpu_custom_call.1} parent=1 // pred_region
      %1432 = dma.done [#allocation4], 512
    $region37: #{tpu_custom_call.1} parent=1 // pred_fallthru
      _
    %1433 = vsyncpa [#allocation3], 1
    %1434 = vsyncpa [#allocation6], 1
    %1435 = vsyncpa [#allocation4], 1

</llo_original>
